<compile_context>
chip_gen: v6e
topology: v6e:2x2x1
jax: 0.10.0
libtpu: 0.0.40
codegen_flags: <defaults>
</compile_context>

<pallas_src>
import functools
import math

import jax
import jax.numpy as jnp
from jax import lax
from jax.experimental import pallas as pl
from jax.experimental.pallas import tpu as pltpu

_LANE = 128
_SUBLANE = 8
# Byte budget for one (x, y) block pair per grid step; double-buffered by the
# BlockSpec pipeline this is ~8 MiB of VMEM for the inputs.
_TARGET_TILE_BYTES = 4 * 1024 * 1024


def _ceil_div(a, b):
    return -(-a // b)


def _round_up(a, b):
    return _ceil_div(a, b) * b


def _tile_accumulate(x_ref, y_ref, out_ref, ngroups, sub, unroll):
    """Fused single pass over `ngroups` (sub, 128) row-groups of the tile.

    Each x/y vreg is loaded from VMEM once and updates all five raw-moment
    accumulators held in registers; the resident output block is bumped once
    per tile.
    """
    zeros = jnp.zeros((sub, _LANE), jnp.float32)

    def body(g, carry):
        sx, sy, sxy, sxx, syy = carry
        r0 = pl.multiple_of(g * sub, sub)
        xg = x_ref[pl.ds(r0, sub), :].astype(jnp.float32)
        yg = y_ref[pl.ds(r0, sub), :].astype(jnp.float32)
        return (sx + xg, sy + yg, sxy + xg * yg, sxx + xg * xg, syy + yg * yg)

    init = (zeros, zeros, zeros, zeros, zeros)
    if unroll is None:  # dynamic trip count (the single partial tile)
        sx, sy, sxy, sxx, syy = lax.fori_loop(0, ngroups, body, init)
    else:               # static trip count, partially unrolled hot loop
        sx, sy, sxy, sxx, syy = lax.fori_loop(0, ngroups, body, init, unroll=unroll)

    out_ref[0, 0] += sx   # Σx
    out_ref[0, 1] += sy   # Σy
    out_ref[0, 2] += sxy  # Σxy
    out_ref[0, 3] += sxx  # Σx²
    out_ref[0, 4] += syy  # Σy²


def _moments_kernel(x_ref, y_ref, out_ref, *, sub, tile_rows, tiles_per_split,
                    rows_total, ragged, unroll):
    # x == target, y == pred (matches the PyTorch forward's variable naming).
    c = pl.program_id(0)
    t = pl.program_id(1)

    @pl.when(t == 0)
    def _init():
        out_ref[...] = jnp.zeros_like(out_ref)

    groups_full = tile_rows // sub

    if not ragged:
        # Every grid step is a full, fully-valid tile (static specialization).
        _tile_accumulate(x_ref, y_ref, out_ref, groups_full, sub, unroll)
    else:
        gidx = c * tiles_per_split + t
        valid = rows_total - gidx * tile_rows  # rows of this tile that are real

        @pl.when(valid >= tile_rows)
        def _full_tile():
            _tile_accumulate(x_ref, y_ref, out_ref, groups_full, sub, unroll)

        @pl.when(jnp.logical_and(valid > 0, valid < tile_rows))
        def _partial_tile():
            # rows_total and tile_rows are multiples of `sub`, so `valid` is
            # too: iterate only the valid row-groups, no element masking.
            _tile_accumulate(x_ref, y_ref, out_ref, valid // sub, sub, None)
        # valid <= 0 (overshoot step): nothing accumulated.


def pearson_correlation_loss(pred, target):
    assert pred.shape == target.shape, (pred.shape, target.shape)
    n = math.prod(pred.shape)
    assert n > 0

    def _canonical(a):
        # Pallas TPU handles 1/2/4-byte elements; demote anything wider.
        if a.dtype.itemsize not in (1, 2, 4):
            a = a.astype(jnp.float32)
        return a

    x = _canonical(target)  # x == target, y == pred (torch naming)
    y = _canonical(pred)
    isx, isy = x.dtype.itemsize, y.dtype.itemsize

    # Dtype-aware sublane alignment: 8 rows (f32), 16 (bf16), 32 (int8/fp8).
    sub = _SUBLANE * (4 // min(isx, isy))
    quantum = sub * _LANE

    # Zero-copy path: ravel + reshape is pure metadata when n % (sub*128) == 0.
    # Otherwise pad with < quantum zeros (zeros contribute nothing to any raw
    # moment); this is the only case that still costs an input copy.
    pad = (-n) % quantum
    rows_total = (n + pad) // _LANE

    def _prep(a):
        flat = jnp.ravel(a)
        if pad:
            flat = jnp.pad(flat, (0, pad))
        return flat.reshape(rows_total, _LANE)

    x2d = _prep(x)
    y2d = _prep(y)

    # Tile sizing: ~4 MiB of (x, y) data per grid step, sublane aligned.
    max_tile_rows = max(
        sub, (_TARGET_TILE_BYTES // (_LANE * (isx + isy))) // sub * sub)

    # 2-way split only when there is enough work for both v7x TensorCores;
    # a size-1 leading axis costs nothing on 1-TC chips (v5e/v6e).
    splits = 2 if rows_total >= 2 * max_tile_rows else 1
    rows_per_split = _round_up(_ceil_div(rows_total, splits), sub)
    tile_rows = min(max_tile_rows, rows_per_split)
    tiles_per_split = _ceil_div(rows_per_split, tile_rows)
    last_block = _ceil_div(rows_total, tile_rows) - 1
    ragged = splits * tiles_per_split * tile_rows != rows_total
    unroll = min(8 if sub == _SUBLANE else 4, tile_rows // sub)

    # Clamp so a (rare) overshoot grid step DMAs an in-bounds block; its
    # accumulation is skipped inside the kernel (valid <= 0).
    in_spec = pl.BlockSpec(
        (tile_rows, _LANE),
        lambda c, t: (jnp.minimum(c * tiles_per_split + t, last_block), 0),
    )

    kernel = functools.partial(
        _moments_kernel, sub=sub, tile_rows=tile_rows,
        tiles_per_split=tiles_per_split, rows_total=rows_total,
        ragged=ragged, unroll=unroll)

    partials = pl.pallas_call(
        kernel,
        out_shape=jax.ShapeDtypeStruct((splits, 5, sub, _LANE), jnp.float32),
        grid_spec=pltpu.PrefetchScalarGridSpec(
            num_scalar_prefetch=0,
            grid=(splits, tiles_per_split),
            in_specs=[in_spec, in_spec],
            out_specs=pl.BlockSpec((1, 5, sub, _LANE), lambda c, t: (c, 0, 0, 0)),
        ),
        compiler_params=pltpu.CompilerParams(
            # TODO(synk): verify on v7x (xprof) that this axis shards across
            # both TensorCores; if not, switch it to pltpu.CORE_PARALLEL.
            dimension_semantics=("parallel", "arbitrary"),
        ),
    )(x2d, y2d)

    # Tiny epilogue: one cross-lane/sublane reduce over the partial moments,
    # then scalar Pearson math (algebraically equal to the centered torch form).
    sums = jnp.sum(partials, axis=(0, 2, 3))  # (5,) = [Σx, Σy, Σxy, Σx², Σy²]
    sx, sy, sxy, sxx, syy = (sums[i] for i in range(5))
    n_f = jnp.float32(n)
    r_num = sxy - sx * sy / n_f                   # Σ (x-mx)(y-my)
    var_x = sxx - sx * sx / n_f                   # Σ (x-mx)²
    var_y = syy - sy * sy / n_f                   # Σ (y-my)²
    # max(..., 0): raw-moment rounding can make the product slightly negative
    # where the exact value is ~0; the centered torch form cannot, so clamp.
    r_den = jnp.sqrt(jnp.maximum(var_x * var_y, 0.0)) + 1e-05
    r = jnp.clip(r_num / r_den, -1.0, 1.0)
    return 1.0 - r * r


def _reference(pred, target):
    x = target.astype(jnp.float32)
    y = pred.astype(jnp.float32)
    mx = jnp.mean(x)
    my = jnp.mean(y)
    xm = x - mx
    ym = y - my
    r_num = jnp.sum(xm * ym)
    r_den = jnp.sqrt(jnp.sum(xm ** 2) * jnp.sum(ym ** 2)) + 1e-05
    r = jnp.clip(r_num / r_den, -1.0, 1.0)
    return 1.0 - r ** 2


if __name__ == "__main__":
    key = jax.random.PRNGKey(0)
    k1, k2 = jax.random.split(key)
    # NCHW-style shapes, as the loss would see conv-model outputs.
    pred = jax.random.normal(k1, (2, 4, 16, 16), dtype=jnp.float32)
    # Target is correlated-but-noisy with pred.
    target = 0.7 * pred + 0.3 * jax.random.normal(k2, (2, 4, 16, 16), dtype=jnp.float32)

    loss = jax.block_until_ready(pearson_correlation_loss(pred, target))

    ref = _reference(pred, target)
    assert jnp.allclose(loss, ref, atol=1e-5, rtol=1e-4), (loss, ref)
    print("KERNEL_OK")
</pallas_src>

<mosaic_0001>
module attributes {stable_mosaic.version = 11 : i64} {
  func.func @_moments_kernel(%arg0: i32, %arg1: i32, %arg2: memref<16x128xf32, #tpu.memory_space<vmem>>, %arg3: memref<16x128xf32, #tpu.memory_space<vmem>>, %arg4: memref<1x5x8x128xf32, #tpu.memory_space<vmem>>) attributes {dimension_semantics = [#tpu.dimension_semantics<parallel>, #tpu.dimension_semantics<arbitrary>], iteration_bounds = array<i64: 1, 1>, scalar_prefetch = 0 : i64, scratch_operands = 0 : i64, tpu.core_type = #tpu.core_type<tc>, window_params = [{transform_indices = @transform_0, window_bounds = array<i64: 16, 128>}, {transform_indices = @transform_1, window_bounds = array<i64: 16, 128>}, {transform_indices = @transform_2, window_bounds = array<i64: 1, 5, 8, 128>}]} {
    %c0_i32 = arith.constant 0 : i32
    %0 = arith.cmpi eq, %arg1, %c0_i32 : i32
    %1 = arith.extui %0 : i1 to i32
    %c0_i32_0 = arith.constant 0 : i32
    %2 = arith.cmpi ne, %1, %c0_i32_0 : i32
    scf.if %2 {
      %cst_42 = arith.constant 0.000000e+00 : f32
      %62 = vector.broadcast %cst_42 : f32 to vector<1x5x8x128xf32>
      %c0_43 = arith.constant 0 : index
      %c0_44 = arith.constant 0 : index
      %c0_45 = arith.constant 0 : index
      %c0_46 = arith.constant 0 : index
      %63 = vector.load %arg4[%c0_43, %c0_44, %c0_45, %c0_46] : memref<1x5x8x128xf32, #tpu.memory_space<vmem>>, vector<1x5x8x128xf32>
      tpu.vector_store %arg4[%c0_43, %c0_44, %c0_45, %c0_46], %62 {strides = array<i32>} : memref<1x5x8x128xf32, #tpu.memory_space<vmem>>, vector<1x5x8x128xf32>,
    } else {
    }
    %cst = arith.constant 0.000000e+00 : f32
    %3 = vector.broadcast %cst : f32 to vector<8x128xf32>
    %c0_i32_1 = arith.constant 0 : i32
    %c8_i32 = arith.constant 8 : i32
    %4 = arith.muli %c0_i32_1, %c8_i32 : i32
    %5 = tpu.assume_multiple %4, 8 : i32
    %6 = arith.index_cast %5 : i32 to index
    %c0 = arith.constant 0 : index
    %7 = vector.load %arg2[%6, %c0] : memref<16x128xf32, #tpu.memory_space<vmem>>, vector<8x128xf32>
    %8 = arith.index_cast %5 : i32 to index
    %c0_2 = arith.constant 0 : index
    %9 = vector.load %arg3[%8, %c0_2] : memref<16x128xf32, #tpu.memory_space<vmem>>, vector<8x128xf32>
    %10 = arith.addf %3, %7 : vector<8x128xf32>
    %11 = arith.addf %3, %9 : vector<8x128xf32>
    %12 = arith.mulf %7, %9 : vector<8x128xf32>
    %13 = arith.addf %3, %12 : vector<8x128xf32>
    %14 = arith.mulf %7, %7 : vector<8x128xf32>
    %15 = arith.addf %3, %14 : vector<8x128xf32>
    %16 = arith.mulf %9, %9 : vector<8x128xf32>
    %17 = arith.addf %3, %16 : vector<8x128xf32>
    %c1_i32 = arith.constant 1 : i32
    %c8_i32_3 = arith.constant 8 : i32
    %18 = arith.muli %c1_i32, %c8_i32_3 : i32
    %19 = tpu.assume_multiple %18, 8 : i32
    %20 = arith.index_cast %19 : i32 to index
    %c0_4 = arith.constant 0 : index
    %21 = vector.load %arg2[%20, %c0_4] : memref<16x128xf32, #tpu.memory_space<vmem>>, vector<8x128xf32>
    %22 = arith.index_cast %19 : i32 to index
    %c0_5 = arith.constant 0 : index
    %23 = vector.load %arg3[%22, %c0_5] : memref<16x128xf32, #tpu.memory_space<vmem>>, vector<8x128xf32>
    %24 = arith.addf %10, %21 : vector<8x128xf32>
    %25 = arith.addf %11, %23 : vector<8x128xf32>
    %26 = arith.mulf %21, %23 : vector<8x128xf32>
    %27 = arith.addf %13, %26 : vector<8x128xf32>
    %28 = arith.mulf %21, %21 : vector<8x128xf32>
    %29 = arith.addf %15, %28 : vector<8x128xf32>
    %30 = arith.mulf %23, %23 : vector<8x128xf32>
    %31 = arith.addf %17, %30 : vector<8x128xf32>
    %c2_i32 = arith.constant 2 : i32
    %c0_6 = arith.constant 0 : index
    %c0_7 = arith.constant 0 : index
    %c0_8 = arith.constant 0 : index
    %c0_9 = arith.constant 0 : index
    %32 = vector.load %arg4[%c0_6, %c0_7, %c0_8, %c0_9] : memref<1x5x8x128xf32, #tpu.memory_space<vmem>>, vector<1x1x8x128xf32>
    %33 = vector.shape_cast %32 : vector<1x1x8x128xf32> to vector<8x128xf32>
    %34 = arith.addf %33, %24 : vector<8x128xf32>
    %c0_10 = arith.constant 0 : index
    %c0_11 = arith.constant 0 : index
    %c0_12 = arith.constant 0 : index
    %c0_13 = arith.constant 0 : index
    %35 = vector.load %arg4[%c0_10, %c0_11, %c0_12, %c0_13] : memref<1x5x8x128xf32, #tpu.memory_space<vmem>>, vector<1x1x8x128xf32>
    %36 = vector.shape_cast %35 : vector<1x1x8x128xf32> to vector<8x128xf32>
    %37 = vector.shape_cast %34 : vector<8x128xf32> to vector<1x1x8x128xf32>
    tpu.vector_store %arg4[%c0_10, %c0_11, %c0_12, %c0_13], %37 {strides = array<i32>} : memref<1x5x8x128xf32, #tpu.memory_space<vmem>>, vector<1x1x8x128xf32>,
    %c0_14 = arith.constant 0 : index
    %c1 = arith.constant 1 : index
    %c0_15 = arith.constant 0 : index
    %c0_16 = arith.constant 0 : index
    %38 = vector.load %arg4[%c0_14, %c1, %c0_15, %c0_16] : memref<1x5x8x128xf32, #tpu.memory_space<vmem>>, vector<1x1x8x128xf32>
    %39 = vector.shape_cast %38 : vector<1x1x8x128xf32> to vector<8x128xf32>
    %40 = arith.addf %39, %25 : vector<8x128xf32>
    %c0_17 = arith.constant 0 : index
    %c1_18 = arith.constant 1 : index
    %c0_19 = arith.constant 0 : index
    %c0_20 = arith.constant 0 : index
    %41 = vector.load %arg4[%c0_17, %c1_18, %c0_19, %c0_20] : memref<1x5x8x128xf32, #tpu.memory_space<vmem>>, vector<1x1x8x128xf32>
    %42 = vector.shape_cast %41 : vector<1x1x8x128xf32> to vector<8x128xf32>
    %43 = vector.shape_cast %40 : vector<8x128xf32> to vector<1x1x8x128xf32>
    tpu.vector_store %arg4[%c0_17, %c1_18, %c0_19, %c0_20], %43 {strides = array<i32>} : memref<1x5x8x128xf32, #tpu.memory_space<vmem>>, vector<1x1x8x128xf32>,
    %c0_21 = arith.constant 0 : index
    %c2 = arith.constant 2 : index
    %c0_22 = arith.constant 0 : index
    %c0_23 = arith.constant 0 : index
    %44 = vector.load %arg4[%c0_21, %c2, %c0_22, %c0_23] : memref<1x5x8x128xf32, #tpu.memory_space<vmem>>, vector<1x1x8x128xf32>
    %45 = vector.shape_cast %44 : vector<1x1x8x128xf32> to vector<8x128xf32>
    %46 = arith.addf %45, %27 : vector<8x128xf32>
    %c0_24 = arith.constant 0 : index
    %c2_25 = arith.constant 2 : index
    %c0_26 = arith.constant 0 : index
    %c0_27 = arith.constant 0 : index
    %47 = vector.load %arg4[%c0_24, %c2_25, %c0_26, %c0_27] : memref<1x5x8x128xf32, #tpu.memory_space<vmem>>, vector<1x1x8x128xf32>
    %48 = vector.shape_cast %47 : vector<1x1x8x128xf32> to vector<8x128xf32>
    %49 = vector.shape_cast %46 : vector<8x128xf32> to vector<1x1x8x128xf32>
    tpu.vector_store %arg4[%c0_24, %c2_25, %c0_26, %c0_27], %49 {strides = array<i32>} : memref<1x5x8x128xf32, #tpu.memory_space<vmem>>, vector<1x1x8x128xf32>,
    %c0_28 = arith.constant 0 : index
    %c3 = arith.constant 3 : index
    %c0_29 = arith.constant 0 : index
    %c0_30 = arith.constant 0 : index
    %50 = vector.load %arg4[%c0_28, %c3, %c0_29, %c0_30] : memref<1x5x8x128xf32, #tpu.memory_space<vmem>>, vector<1x1x8x128xf32>
    %51 = vector.shape_cast %50 : vector<1x1x8x128xf32> to vector<8x128xf32>
    %52 = arith.addf %51, %29 : vector<8x128xf32>
    %c0_31 = arith.constant 0 : index
    %c3_32 = arith.constant 3 : index
    %c0_33 = arith.constant 0 : index
    %c0_34 = arith.constant 0 : index
    %53 = vector.load %arg4[%c0_31, %c3_32, %c0_33, %c0_34] : memref<1x5x8x128xf32, #tpu.memory_space<vmem>>, vector<1x1x8x128xf32>
    %54 = vector.shape_cast %53 : vector<1x1x8x128xf32> to vector<8x128xf32>
    %55 = vector.shape_cast %52 : vector<8x128xf32> to vector<1x1x8x128xf32>
    tpu.vector_store %arg4[%c0_31, %c3_32, %c0_33, %c0_34], %55 {strides = array<i32>} : memref<1x5x8x128xf32, #tpu.memory_space<vmem>>, vector<1x1x8x128xf32>,
    %c0_35 = arith.constant 0 : index
    %c4 = arith.constant 4 : index
    %c0_36 = arith.constant 0 : index
    %c0_37 = arith.constant 0 : index
    %56 = vector.load %arg4[%c0_35, %c4, %c0_36, %c0_37] : memref<1x5x8x128xf32, #tpu.memory_space<vmem>>, vector<1x1x8x128xf32>
    %57 = vector.shape_cast %56 : vector<1x1x8x128xf32> to vector<8x128xf32>
    %58 = arith.addf %57, %31 : vector<8x128xf32>
    %c0_38 = arith.constant 0 : index
    %c4_39 = arith.constant 4 : index
    %c0_40 = arith.constant 0 : index
    %c0_41 = arith.constant 0 : index
    %59 = vector.load %arg4[%c0_38, %c4_39, %c0_40, %c0_41] : memref<1x5x8x128xf32, #tpu.memory_space<vmem>>, vector<1x1x8x128xf32>
    %60 = vector.shape_cast %59 : vector<1x1x8x128xf32> to vector<8x128xf32>
    %61 = vector.shape_cast %58 : vector<8x128xf32> to vector<1x1x8x128xf32>
    tpu.vector_store %arg4[%c0_38, %c4_39, %c0_40, %c0_41], %61 {strides = array<i32>} : memref<1x5x8x128xf32, #tpu.memory_space<vmem>>, vector<1x1x8x128xf32>,
    return
  }
  func.func @transform_0(%arg0: i32, %arg1: i32) -> (i32, i32) {
    %c1_i32 = arith.constant 1 : i32
    %0 = arith.muli %arg0, %c1_i32 : i32
    %1 = arith.addi %0, %arg1 : i32
    %c0_i32 = arith.constant 0 : i32
    %2 = arith.minsi %1, %c0_i32 : i32
    %c0_i32_0 = arith.constant 0 : i32
    %c0_i32_1 = arith.constant 0 : i32
    return %2, %c0_i32_0 : i32, i32
  }
  func.func @transform_1(%arg0: i32, %arg1: i32) -> (i32, i32) {
    %c1_i32 = arith.constant 1 : i32
    %0 = arith.muli %arg0, %c1_i32 : i32
    %1 = arith.addi %0, %arg1 : i32
    %c0_i32 = arith.constant 0 : i32
    %2 = arith.minsi %1, %c0_i32 : i32
    %c0_i32_0 = arith.constant 0 : i32
    %c0_i32_1 = arith.constant 0 : i32
    return %2, %c0_i32_0 : i32, i32
  }
  func.func @transform_2(%arg0: i32, %arg1: i32) -> (i32, i32, i32, i32) {
    %c0_i32 = arith.constant 0 : i32
    %c0_i32_0 = arith.constant 0 : i32
    %c0_i32_1 = arith.constant 0 : i32
    %c0_i32_2 = arith.constant 0 : i32
    return %arg0, %c0_i32, %c0_i32_0, %c0_i32_1 : i32, i32, i32, i32
  }
}

</mosaic_0001>

<llo_original>
// kernel: tpu_custom_call.1
$region0: #{tpu_custom_call.1}
  #allocation0 [shape = 'u32[]', space=smem, size = 0x4, offset = 0x4, fixed_abs, tag = 'smem constant byte address 0x4 - core index']
  #allocation1 [shape = 'u32[144,128]{1,0:T(1,128)}', space=vmem, size = 0x12000, scoped, tag = 'internal scratch']
  %s0 = inlined_call_operand.hbm [shape: f32[16,128], index: 0, kind: input, shape index: {}]
  %s1 = inlined_call_operand.hbm [shape: f32[16,128], index: 1, kind: input, shape index: {}]
  %s2 = inlined_call_operand.hbm [shape: f32[1,5,8,128], index: 2, kind: output, shape index: {}]
  %s3 = sld [smem:[#allocation0]]
  $region30: #{tpu_custom_call.1} parent=0
    _
  %s5 = ssub.s32 1, %s3
  %s6 = scalar_select 0, %s5, %s3
  $region1: #{tpu_custom_call.1} parent=0
    #allocation2 [shape = 'u8[8192]{0}', space=vmem, size = 0x2000, scoped, tag = 'input window, operand 0, single buffered']
    #allocation3 [shape = 's32[1]{0}', space=sflag, size = 0x4, scoped, tag = 'scoped memory for tpu_custom_call.1']
    #allocation4 [shape = 's32[1]{0}', space=sflag, size = 0x4, scoped, tag = 'scoped memory for tpu_custom_call.1']
    #allocation5 [shape = 'u8[8192]{0}', space=vmem, size = 0x2000, scoped, tag = 'input window, operand 1, single buffered']
    #allocation6 [shape = 's32[1]{0}', space=sflag, size = 0x4, scoped, tag = 'scoped memory for tpu_custom_call.1']
    #allocation7 [shape = 'u8[20480]{0}', space=vmem, size = 0x5000, scoped, tag = 'output window, operand 0, single buffered']
    %7 = vsyncpa [#allocation3], 0
    %8 = vsyncpa [#allocation6], 0
    %9 = vsyncpa [#allocation4], 0
    // Predicated region
    $region2: #{tpu_custom_call.1} parent=1 // pred_check
      _
    $region3: #{tpu_custom_call.1} parent=1 // pred_check_branch
      %11 = sbr.rel (0) target = $region5
    $region4: #{tpu_custom_call.1} parent=1 // pred_region
      %s12 = sadd.s32 0, 0
      %p13 = scmp.lt.s32.totalorder %s12, 0
      %s14 = scalar_select %p13, %s12, 0
      %s15 = smul.u32 2, %s14
      %s17 = ssub.s32 256, 256
      %18 = vsyncadd [#allocation3], %s17
      %s19 = smul.addr %s15, 128
      %s20 = scalar_lea.hbm %s0, %s19
      %s21 = sshll.u32 [#allocation2], 4
      %s22 = int_to_ptr.vmem [resolvable:$true] %s21
      %27 = dma.hbm_to_vmem [thread:$0]  %s20, 256, %s22, [#allocation3], 128, 128, 8
    $region5: #{tpu_custom_call.1} parent=1 // pred_fallthru
      _
    // Predicated region
    $region6: #{tpu_custom_call.1} parent=1 // pred_check
      _
    $region7: #{tpu_custom_call.1} parent=1 // pred_check_branch
      %29 = sbr.rel (0) target = $region9
    $region8: #{tpu_custom_call.1} parent=1 // pred_region
      %s30 = sadd.s32 0, 0
      %p31 = scmp.lt.s32.totalorder %s30, 0
      %s32 = scalar_select %p31, %s30, 0
      %s33 = smul.u32 2, %s32
      %s35 = ssub.s32 256, 256
      %36 = vsyncadd [#allocation6], %s35
      %s37 = smul.addr %s33, 128
      %s38 = scalar_lea.hbm %s1, %s37
      %s39 = sshll.u32 [#allocation5], 4
      %s40 = int_to_ptr.vmem [resolvable:$true] %s39
      %45 = dma.hbm_to_vmem [thread:$0]  %s38, 256, %s40, [#allocation6], 128, 128, 8
    $region9: #{tpu_custom_call.1} parent=1 // pred_fallthru
      _
    // Predicated region
    $region10: #{tpu_custom_call.1} parent=1 // pred_check
      _
    $region11: #{tpu_custom_call.1} parent=1 // pred_check_branch
      %47 = sbr.rel (0) target = $region13
    $region12: #{tpu_custom_call.1} parent=1 // pred_region
      %48 = dma.done [#allocation3], 256
    $region13: #{tpu_custom_call.1} parent=1 // pred_fallthru
      _
    // Predicated region
    $region14: #{tpu_custom_call.1} parent=1 // pred_check
      _
    $region15: #{tpu_custom_call.1} parent=1 // pred_check_branch
      %50 = sbr.rel (0) target = $region17
    $region16: #{tpu_custom_call.1} parent=1 // pred_region
      %51 = dma.done [#allocation6], 256
    $region17: #{tpu_custom_call.1} parent=1 // pred_fallthru
      _
    %s52 = sadd.s32 0, 0
    %p53 = scmp.lt.s32.totalorder %s52, 0
    %s54 = scalar_select %p53, %s52, 0
    %s55 = smul.u32 2, %s54
    %s56 = sadd.s32 0, 0
    %p57 = scmp.lt.s32.totalorder %s56, 0
    %s58 = scalar_select %p57, %s56, 0
    %s59 = smul.u32 2, %s58
    %p60 = scmp.eq.s32.totalorder 0, 0
    // Predicated region
    $region18: #{tpu_custom_call.1} parent=1 // pred_check
      %p61 = pneg %p60
    $region19: #{tpu_custom_call.1} parent=1 // pred_check_branch
      %63 = sbr.rel (%p61) target = $region21
    $region20: #{tpu_custom_call.1} parent=1 // pred_region
      %64 = vst [vmem:[#allocation7] sm:$0xff] 0.0
      %65 = vst [vmem:[#allocation7 + $0x8] sm:$0xff] 0.0
      %66 = vst [vmem:[#allocation7 + $0x10] sm:$0xff] 0.0
      %67 = vst [vmem:[#allocation7 + $0x18] sm:$0xff] 0.0
      %68 = vst [vmem:[#allocation7 + $0x20] sm:$0xff] 0.0
    $region21: #{tpu_custom_call.1} parent=1 // pred_fallthru
      _
    %v69 = vld [vmem:[#allocation2] sm:$0xff]
    %v70 = vld [vmem:[#allocation5] sm:$0xff]
    %v71 = vadd.f32 %v69, 0.0
    %v72 = vadd.f32 %v70, 0.0
    %v73 = vmul.f32 %v69, %v70
    %v74 = vadd.f32 %v73, 0.0
    %v75 = vmul.f32 %v69, %v69
    %v76 = vadd.f32 %v75, 0.0
    %v77 = vmul.f32 %v70, %v70
    %v78 = vadd.f32 %v77, 0.0
    %s79 = scalar_lea.vmem [#allocation2], 8
    %v80 = vld [vmem:[%s79] sm:$0xff]
    %s81 = scalar_lea.vmem [#allocation5], 8
    %v82 = vld [vmem:[%s81] sm:$0xff]
    %v83 = vadd.f32 %v71, %v80
    %v84 = vadd.f32 %v72, %v82
    %v85 = vmul.f32 %v80, %v82
    %v86 = vadd.f32 %v74, %v85
    %v87 = vmul.f32 %v80, %v80
    %v88 = vadd.f32 %v76, %v87
    %v89 = vmul.f32 %v82, %v82
    %v90 = vadd.f32 %v78, %v89
    %v91 = vld [vmem:[#allocation7] sm:$0xff]
    %v92 = vadd.f32 %v91, %v83
    %93 = vst [vmem:[#allocation7] sm:$0xff] %v92
    %s94 = scalar_lea.vmem [#allocation7], 8
    %v95 = vld [vmem:[%s94] sm:$0xff]
    %v96 = vadd.f32 %v95, %v84
    %97 = vst [vmem:[%s94] sm:$0xff] %v96
    %s98 = scalar_lea.vmem [#allocation7], 16
    %v99 = vld [vmem:[%s98] sm:$0xff]
    %v100 = vadd.f32 %v99, %v86
    %101 = vst [vmem:[%s98] sm:$0xff] %v100
    %s102 = scalar_lea.vmem [#allocation7], 24
    %v103 = vld [vmem:[%s102] sm:$0xff]
    %v104 = vadd.f32 %v103, %v88
    %105 = vst [vmem:[%s102] sm:$0xff] %v104
    %s106 = scalar_lea.vmem [#allocation7], 32
    %v107 = vld [vmem:[%s106] sm:$0xff]
    %v108 = vadd.f32 %v107, %v90
    %109 = vst [vmem:[%s106] sm:$0xff] %v108
    // Predicated region
    $region22: #{tpu_custom_call.1} parent=1 // pred_check
      _
    $region23: #{tpu_custom_call.1} parent=1 // pred_check_branch
      %111 = sbr.rel (0) target = $region25
    $region24: #{tpu_custom_call.1} parent=1 // pred_region
      %s113 = ssub.s32 640, 640
      %114 = vsyncadd [#allocation4], %s113
      %s115 = sshll.u32 [#allocation7], 4
      %s116 = int_to_ptr.vmem [resolvable:$true] %s115
      %121 = dma.vmem_to_hbm [thread:$0]  %s116, 640, %s2, [#allocation4], 128, 128, 8
    $region25: #{tpu_custom_call.1} parent=1 // pred_fallthru
      _
    // Predicated region
    $region26: #{tpu_custom_call.1} parent=1 // pred_check
      _
    $region27: #{tpu_custom_call.1} parent=1 // pred_check_branch
      %123 = sbr.rel (0) target = $region29
    $region28: #{tpu_custom_call.1} parent=1 // pred_region
      %124 = dma.done [#allocation4], 640
    $region29: #{tpu_custom_call.1} parent=1 // pred_fallthru
      _
    %125 = vsyncpa [#allocation3], 1
    %126 = vsyncpa [#allocation6], 1
    %127 = vsyncpa [#allocation4], 1

</llo_original>
